<compile_context>
chip_gen: v7x
topology: tpu7x:2x2x1
jax: 0.10.0
libtpu: 0.0.40
codegen_flags: <defaults>
</compile_context>

<pallas_src>
import functools

import jax
import jax.numpy as jnp
from jax.experimental import pallas as pl
from jax.experimental.pallas import tpu as pltpu

HIDDEN = 32
_MXU_DTYPE = jnp.bfloat16  # matmul-input dtype on every TPU generation


def _act_dtype():
    """tanh/bias dtype: bf16 on v6e/v7x (native bf16 VPU/EUP), f32 otherwise."""
    try:
        kind = jax.devices()[0].device_kind.lower()
    except Exception:
        return jnp.float32
    if "v6" in kind or "v7" in kind:
        return jnp.bfloat16
    return jnp.float32


def _choose_tile_b(B, cap=16384):
    """Lane-aligned batch tile. Large tiles amortize the ~0.35us per-step overhead;
    for B >= 256 keep >= 2 grid steps so v7x can shard the parallel axis across
    both TensorCores."""
    if B < 256:
        return B  # single block == full array dims (allowed by the (8,128) rule)
    half = pl.cdiv(pl.cdiv(B, 2), 128) * 128
    return max(128, min(cap, half))


def _mlp_kernel(xT_ref, w1_ref, b1_ref, w2_ref, b2_ref, w3_ref, b3_ref, o_ref):
    """Fused 3-layer MLP, batch on the lane axis.

    xT_ref : (input_dim, tile_b)  bf16 activations (batch on lanes)
    wN_ref : (out_features, in_features) bf16 (PyTorch nn.Linear layout)
    b1/b2  : (HIDDEN, 1) in act dtype (bf16 on v6e/v7x, f32 on v5e)
    b3     : (output_dim, 1) f32
    o_ref  : (output_dim, tile_b) f32 (lane-dense store)
    """
    mxu_dtype = w1_ref.dtype
    act_dtype = b1_ref.dtype

    x = xT_ref[...]  # already bf16 from HBM -> no in-kernel full-tile cast

    # fc1 + tanh -> (HIDDEN, tile_b); f32 accumulate, activation math in act dtype.
    s1 = jnp.dot(w1_ref[...], x, preferred_element_type=jnp.float32)
    h1 = jnp.tanh(s1.astype(act_dtype) + b1_ref[...])

    # fc2 + tanh -> (HIDDEN, tile_b)
    s2 = jnp.dot(w2_ref[...], h1.astype(mxu_dtype), preferred_element_type=jnp.float32)
    h2 = jnp.tanh(s2.astype(act_dtype) + b2_ref[...])

    # fc3 -> (output_dim, tile_b); bias add and store stay f32, lane-dense.
    out = jnp.dot(w3_ref[...], h2.astype(mxu_dtype), preferred_element_type=jnp.float32)
    o_ref[...] = (out + b3_ref[...]).astype(o_ref.dtype)


def multiclass_forward_feature_major(xT, params, *, tile_b=None, act_dtype=None):
    """Feature-major entry point (skips wrapper transposes).

    xT: (input_dim, B) — any float dtype (cast to bf16 for the MXU stream).
    Returns (output_dim, B) float32.
    """
    input_dim, B = xT.shape
    output_dim = params["w3"].shape[0]

    if act_dtype is None:
        act_dtype = _act_dtype()
    if tile_b is None:
        tile_b = _choose_tile_b(B)
    else:
        tile_b = B if tile_b >= B else max(128, (tile_b // 128) * 128)
    num_tiles = pl.cdiv(B, tile_b)

    xT = xT.astype(_MXU_DTYPE)

    # Weights stream as bf16 (MXU inputs); b1/b2 in act dtype (added pre-tanh),
    # b3 kept f32 (added to the f32 accumulator before the final store).
    w1 = params["w1"].astype(_MXU_DTYPE)
    w2 = params["w2"].astype(_MXU_DTYPE)
    w3 = params["w3"].astype(_MXU_DTYPE)
    b1 = params["b1"].astype(act_dtype).reshape(HIDDEN, 1)
    b2 = params["b2"].astype(act_dtype).reshape(HIDDEN, 1)
    b3 = params["b3"].astype(jnp.float32).reshape(output_dim, 1)

    flops = 2 * B * (input_dim * HIDDEN + HIDDEN * HIDDEN + HIDDEN * output_dim)
    transcendentals = 2 * HIDDEN * B
    bytes_accessed = (
        B * input_dim * 2  # bf16 x stream
        + B * output_dim * 4  # f32 output
        + sum(int(a.size) * a.dtype.itemsize for a in (w1, w2, w3, b1, b2, b3))
    )

    out_T = pl.pallas_call(
        _mlp_kernel,
        out_shape=jax.ShapeDtypeStruct((output_dim, B), jnp.float32),
        grid_spec=pltpu.PrefetchScalarGridSpec(
            num_scalar_prefetch=0,
            grid=(num_tiles,),
            in_specs=[
                # batch-tiled activations (batch on lanes); ragged tail handled by
                # Pallas masked partial reads/writes — no pre-padding copy.
                pl.BlockSpec((input_dim, tile_b), lambda i: (0, i)),
                # weights / biases: grid-invariant blocks (constant index_map ->
                # fetched once, VMEM-resident; tiny vs the x tile)
                pl.BlockSpec((HIDDEN, input_dim), lambda i: (0, 0)),
                pl.BlockSpec((HIDDEN, 1), lambda i: (0, 0)),
                pl.BlockSpec((HIDDEN, HIDDEN), lambda i: (0, 0)),
                pl.BlockSpec((HIDDEN, 1), lambda i: (0, 0)),
                pl.BlockSpec((output_dim, HIDDEN), lambda i: (0, 0)),
                pl.BlockSpec((output_dim, 1), lambda i: (0, 0)),
            ],
            out_specs=pl.BlockSpec((output_dim, tile_b), lambda i: (0, i)),
        ),
        compiler_params=pltpu.CompilerParams(
            dimension_semantics=("parallel",),  # megacore-shardable batch axis
            vmem_limit_bytes=32 * 1024 * 1024,  # safe on 64 MiB v7x
        ),
        cost_estimate=pl.CostEstimate(
            flops=flops,
            transcendentals=transcendentals,
            bytes_accessed=bytes_accessed,
        ),
    )(xT, w1, b1, w2, b2, w3, b3)

    return out_T


@functools.partial(jax.jit, static_argnames=("tile_b",))
def multiclass_forward(x, params, *, tile_b=None):
    """Batch-major API matching the PyTorch module: x (B, input_dim) -> (B, output_dim).

    The bf16 downcast is fused with the transpose so the layout-plumbing copy is
    half-width; callers that can keep a feature-major layout should use
    multiclass_forward_feature_major directly and skip both transposes.
    """
    xT = x.T.astype(_MXU_DTYPE)  # fused transpose + downcast (one XLA copy, bf16)
    out_T = multiclass_forward_feature_major(xT, params, tile_b=tile_b)
    return out_T.T.astype(x.dtype)


def init_params(key, input_dim, output_dim):
    """Deterministic init mimicking nn.Linear (uniform +-1/sqrt(fan_in)),
    weights stored PyTorch-style as (out_features, in_features)."""
    ks = jax.random.split(key, 6)

    def linear(kw, kb, fan_in, fan_out):
        bound = 1.0 / jnp.sqrt(fan_in)
        w = jax.random.uniform(kw, (fan_out, fan_in), jnp.float32, -bound, bound)
        b = jax.random.uniform(kb, (fan_out,), jnp.float32, -bound, bound)
        return w, b

    w1, b1 = linear(ks[0], ks[1], input_dim, HIDDEN)
    w2, b2 = linear(ks[2], ks[3], HIDDEN, HIDDEN)
    w3, b3 = linear(ks[4], ks[5], HIDDEN, output_dim)
    return {"w1": w1, "b1": b1, "w2": w2, "b2": b2, "w3": w3, "b3": b3}


def reference_forward(x, p):
    h1 = jnp.tanh(x @ p["w1"].T + p["b1"])
    h2 = jnp.tanh(h1 @ p["w2"].T + p["b2"])
    return h2 @ p["w3"].T + p["b3"]


if __name__ == "__main__":
    key = jax.random.PRNGKey(0)
    k_x, k_p = jax.random.split(key)

    batch, input_dim, output_dim = 8, 16, 4
    x = jax.random.normal(k_x, (batch, input_dim), jnp.float32)
    params = init_params(k_p, input_dim, output_dim)

    out = multiclass_forward(x, params)
    out = jax.block_until_ready(out)

    ref = reference_forward(x, params)
    assert out.shape == (batch, output_dim)

    # bf16 MXU inputs on every generation -> bf16-level tolerance vs f32 reference.
    tol = 5e-2
    assert jnp.allclose(out, ref, atol=tol, rtol=tol), "mismatch vs reference"
    print("KERNEL_OK")
</pallas_src>

<mosaic_0001>
module attributes {stable_mosaic.version = 11 : i64} {
  func.func @_mlp_kernel(%arg0: i32, %arg1: memref<16x8xbf16, #tpu.memory_space<vmem>>, %arg2: memref<32x16xbf16, #tpu.memory_space<vmem>>, %arg3: memref<32x1xf32, #tpu.memory_space<vmem>>, %arg4: memref<32x32xbf16, #tpu.memory_space<vmem>>, %arg5: memref<32x1xf32, #tpu.memory_space<vmem>>, %arg6: memref<4x32xbf16, #tpu.memory_space<vmem>>, %arg7: memref<4x1xf32, #tpu.memory_space<vmem>>, %arg8: memref<4x8xf32, #tpu.memory_space<vmem>>) attributes {dimension_semantics = [#tpu.dimension_semantics<parallel>], iteration_bounds = array<i64: 1>, scalar_prefetch = 0 : i64, scratch_operands = 0 : i64, tpu.core_type = #tpu.core_type<tc>, window_params = [{transform_indices = @transform_0, window_bounds = array<i64: 16, 8>}, {pipeline_mode = #tpu.pipeline_mode<synchronous>, transform_indices = @transform_1, window_bounds = array<i64: 32, 16>}, {pipeline_mode = #tpu.pipeline_mode<synchronous>, transform_indices = @transform_2, window_bounds = array<i64: 32, 1>}, {pipeline_mode = #tpu.pipeline_mode<synchronous>, transform_indices = @transform_3, window_bounds = array<i64: 32, 32>}, {pipeline_mode = #tpu.pipeline_mode<synchronous>, transform_indices = @transform_4, window_bounds = array<i64: 32, 1>}, {pipeline_mode = #tpu.pipeline_mode<synchronous>, transform_indices = @transform_5, window_bounds = array<i64: 4, 32>}, {pipeline_mode = #tpu.pipeline_mode<synchronous>, transform_indices = @transform_6, window_bounds = array<i64: 4, 1>}, {transform_indices = @transform_7, window_bounds = array<i64: 4, 8>}]} {
    %c0 = arith.constant 0 : index
    %c0_0 = arith.constant 0 : index
    %0 = vector.load %arg1[%c0, %c0_0] : memref<16x8xbf16, #tpu.memory_space<vmem>>, vector<16x8xbf16>
    %c0_1 = arith.constant 0 : index
    %c0_2 = arith.constant 0 : index
    %1 = vector.load %arg2[%c0_1, %c0_2] : memref<32x16xbf16, #tpu.memory_space<vmem>>, vector<32x16xbf16>
    %cst = arith.constant dense<0.000000e+00> : vector<32x8xf32>
    %2 = tpu.matmul %1, %0, %cst {dimension_numbers = #tpu.dot_dimension_numbers<[1], [0], [0], [1], [0, 0, 1, 1], [], []>} : vector<32x16xbf16>, vector<16x8xbf16>, vector<32x8xf32> -> vector<32x8xf32>
    %c0_3 = arith.constant 0 : index
    %c0_4 = arith.constant 0 : index
    %3 = vector.load %arg3[%c0_3, %c0_4] : memref<32x1xf32, #tpu.memory_space<vmem>>, vector<32x1xf32>
    %4 = vector.broadcast %3 : vector<32x1xf32> to vector<32x8xf32>
    %5 = arith.addf %2, %4 : vector<32x8xf32>
    %6 = math.tanh %5 : vector<32x8xf32>
    %c0_5 = arith.constant 0 : index
    %c0_6 = arith.constant 0 : index
    %7 = vector.load %arg4[%c0_5, %c0_6] : memref<32x32xbf16, #tpu.memory_space<vmem>>, vector<32x32xbf16>
    %8 = arith.truncf %6 : vector<32x8xf32> to vector<32x8xbf16>
    %cst_7 = arith.constant dense<0.000000e+00> : vector<32x8xf32>
    %9 = tpu.matmul %7, %8, %cst_7 {dimension_numbers = #tpu.dot_dimension_numbers<[1], [0], [0], [1], [0, 0, 1, 1], [], []>} : vector<32x32xbf16>, vector<32x8xbf16>, vector<32x8xf32> -> vector<32x8xf32>
    %c0_8 = arith.constant 0 : index
    %c0_9 = arith.constant 0 : index
    %10 = vector.load %arg5[%c0_8, %c0_9] : memref<32x1xf32, #tpu.memory_space<vmem>>, vector<32x1xf32>
    %11 = vector.broadcast %10 : vector<32x1xf32> to vector<32x8xf32>
    %12 = arith.addf %9, %11 : vector<32x8xf32>
    %13 = math.tanh %12 : vector<32x8xf32>
    %c0_10 = arith.constant 0 : index
    %c0_11 = arith.constant 0 : index
    %14 = vector.load %arg6[%c0_10, %c0_11] : memref<4x32xbf16, #tpu.memory_space<vmem>>, vector<4x32xbf16>
    %15 = arith.truncf %13 : vector<32x8xf32> to vector<32x8xbf16>
    %cst_12 = arith.constant dense<0.000000e+00> : vector<4x8xf32>
    %16 = tpu.matmul %14, %15, %cst_12 {dimension_numbers = #tpu.dot_dimension_numbers<[1], [0], [0], [1], [0, 0, 1, 1], [], []>} : vector<4x32xbf16>, vector<32x8xbf16>, vector<4x8xf32> -> vector<4x8xf32>
    %c0_13 = arith.constant 0 : index
    %c0_14 = arith.constant 0 : index
    %17 = vector.load %arg7[%c0_13, %c0_14] : memref<4x1xf32, #tpu.memory_space<vmem>>, vector<4x1xf32>
    %18 = vector.broadcast %17 : vector<4x1xf32> to vector<4x8xf32>
    %19 = arith.addf %16, %18 : vector<4x8xf32>
    %c0_15 = arith.constant 0 : index
    %c0_16 = arith.constant 0 : index
    %20 = vector.load %arg8[%c0_15, %c0_16] : memref<4x8xf32, #tpu.memory_space<vmem>>, vector<4x8xf32>
    tpu.vector_store %arg8[%c0_15, %c0_16], %19 {strides = array<i32>} : memref<4x8xf32, #tpu.memory_space<vmem>>, vector<4x8xf32>,
    return
  }
  func.func @transform_0(%arg0: i32) -> (i32, i32) {
    %c0_i32 = arith.constant 0 : i32
    %c0_i32_0 = arith.constant 0 : i32
    return %c0_i32, %arg0 : i32, i32
  }
  func.func @transform_1(%arg0: i32) -> (i32, i32) {
    %c0_i32 = arith.constant 0 : i32
    %c0_i32_0 = arith.constant 0 : i32
    %c0_i32_1 = arith.constant 0 : i32
    return %c0_i32, %c0_i32_0 : i32, i32
  }
  func.func @transform_2(%arg0: i32) -> (i32, i32) {
    %c0_i32 = arith.constant 0 : i32
    %c0_i32_0 = arith.constant 0 : i32
    %c0_i32_1 = arith.constant 0 : i32
    return %c0_i32, %c0_i32_0 : i32, i32
  }
  func.func @transform_3(%arg0: i32) -> (i32, i32) {
    %c0_i32 = arith.constant 0 : i32
    %c0_i32_0 = arith.constant 0 : i32
    %c0_i32_1 = arith.constant 0 : i32
    return %c0_i32, %c0_i32_0 : i32, i32
  }
  func.func @transform_4(%arg0: i32) -> (i32, i32) {
    %c0_i32 = arith.constant 0 : i32
    %c0_i32_0 = arith.constant 0 : i32
    %c0_i32_1 = arith.constant 0 : i32
    return %c0_i32, %c0_i32_0 : i32, i32
  }
  func.func @transform_5(%arg0: i32) -> (i32, i32) {
    %c0_i32 = arith.constant 0 : i32
    %c0_i32_0 = arith.constant 0 : i32
    %c0_i32_1 = arith.constant 0 : i32
    return %c0_i32, %c0_i32_0 : i32, i32
  }
  func.func @transform_6(%arg0: i32) -> (i32, i32) {
    %c0_i32 = arith.constant 0 : i32
    %c0_i32_0 = arith.constant 0 : i32
    %c0_i32_1 = arith.constant 0 : i32
    return %c0_i32, %c0_i32_0 : i32, i32
  }
  func.func @transform_7(%arg0: i32) -> (i32, i32) {
    %c0_i32 = arith.constant 0 : i32
    %c0_i32_0 = arith.constant 0 : i32
    return %c0_i32, %arg0 : i32, i32
  }
}

</mosaic_0001>

<llo_original>
// kernel: multiclass_forward.1
$region0: #{multiclass_forward.1}
  #allocation0 [shape = 'u32[]', space=smem, size = 0x4, offset = 0x4, fixed_abs, tag = 'smem constant byte address 0x4 - core index']
  #allocation1 [shape = 'u32[144,128]{1,0:T(1,128)}', space=vmem, size = 0x12000, scoped, tag = 'internal scratch']
  %s0 = inlined_call_operand.vmem [shape: bf16[16,8], index: 0, kind: input, shape index: {}]
  %s1 = inlined_call_operand.vmem [shape: bf16[32,16], index: 1, kind: input, shape index: {}]
  %s2 = inlined_call_operand.vmem [shape: f32[32,1], index: 2, kind: input, shape index: {}]
  %s3 = inlined_call_operand.vmem [shape: bf16[32,32], index: 3, kind: input, shape index: {}]
  %s4 = inlined_call_operand.vmem [shape: f32[32,1], index: 4, kind: input, shape index: {}]
  %s5 = inlined_call_operand.vmem [shape: bf16[4,32], index: 5, kind: input, shape index: {}]
  %s6 = inlined_call_operand.vmem [shape: f32[4,1], index: 6, kind: input, shape index: {}]
  %s7 = inlined_call_operand.hbm [shape: f32[4,8], index: 7, kind: output, shape index: {}]
  %s8 = sld [smem:[#allocation0]]
  $region38: #{multiclass_forward.1} parent=0
    _
  %s10 = ssub.s32 1, %s8
  %s11 = scalar_select 0, %s10, %s8
  $region1: #{multiclass_forward.1} parent=0
    #allocation2 [shape = 'u8[2048]{0}', space=vmem, size = 0x800, scoped, tag = 'output window, operand 0, single buffered']
    #allocation3 [shape = 's32[1]{0}', space=sflag, size = 0x4, scoped, tag = 'scoped memory for multiclass_forward.1']
    %12 = vsyncpa [#allocation3], 0
    // Predicated region
    $region2: #{multiclass_forward.1} parent=1 // pred_check
      _
    $region3: #{multiclass_forward.1} parent=1 // pred_check_branch
      %14 = sbr.rel (0) target = $region5
    $region4: #{multiclass_forward.1} parent=1 // pred_region
      _
    $region5: #{multiclass_forward.1} parent=1 // pred_fallthru
      _
    // Predicated region
    $region6: #{multiclass_forward.1} parent=1 // pred_check
      _
    $region7: #{multiclass_forward.1} parent=1 // pred_check_branch
      %16 = sbr.rel (0) target = $region9
    $region8: #{multiclass_forward.1} parent=1 // pred_region
      _
    $region9: #{multiclass_forward.1} parent=1 // pred_fallthru
      _
    // Predicated region
    $region10: #{multiclass_forward.1} parent=1 // pred_check
      _
    $region11: #{multiclass_forward.1} parent=1 // pred_check_branch
      %18 = sbr.rel (0) target = $region13
    $region12: #{multiclass_forward.1} parent=1 // pred_region
      _
    $region13: #{multiclass_forward.1} parent=1 // pred_fallthru
      _
    // Predicated region
    $region14: #{multiclass_forward.1} parent=1 // pred_check
      _
    $region15: #{multiclass_forward.1} parent=1 // pred_check_branch
      %20 = sbr.rel (0) target = $region17
    $region16: #{multiclass_forward.1} parent=1 // pred_region
      _
    $region17: #{multiclass_forward.1} parent=1 // pred_fallthru
      _
    // Predicated region
    $region18: #{multiclass_forward.1} parent=1 // pred_check
      _
    $region19: #{multiclass_forward.1} parent=1 // pred_check_branch
      %22 = sbr.rel (0) target = $region21
    $region20: #{multiclass_forward.1} parent=1 // pred_region
      _
    $region21: #{multiclass_forward.1} parent=1 // pred_fallthru
      _
    // Predicated region
    $region22: #{multiclass_forward.1} parent=1 // pred_check
      _
    $region23: #{multiclass_forward.1} parent=1 // pred_check_branch
      %24 = sbr.rel (0) target = $region25
    $region24: #{multiclass_forward.1} parent=1 // pred_region
      _
    $region25: #{multiclass_forward.1} parent=1 // pred_fallthru
      _
    // Predicated region
    $region26: #{multiclass_forward.1} parent=1 // pred_check
      _
    $region27: #{multiclass_forward.1} parent=1 // pred_check_branch
      %26 = sbr.rel (0) target = $region29
    $region28: #{multiclass_forward.1} parent=1 // pred_region
      _
    $region29: #{multiclass_forward.1} parent=1 // pred_fallthru
      _
    %v28 = vld [vmem:[%s0] sm:$0xf]
    %v29 = vld [vmem:[%s0 + $0x4] sm:$0xf]
    %v30 = vld [vmem:[%s1] sm:$0xf]
    %v31 = vld [vmem:[%s1 + $0x4] sm:$0xf]
    %v32 = vld [vmem:[%s1 + $0x8] sm:$0xf]
    %v33 = vld [vmem:[%s1 + $0xc] sm:$0xf]
    %v34 = vld [vmem:[%s2] sm:$0xff]
    %v35 = vld [vmem:[%s2 + $0x8] sm:$0xff]
    %v36 = vld [vmem:[%s2 + $0x10] sm:$0xff]
    %v37 = vld [vmem:[%s2 + $0x18] sm:$0xff]
    %39 = vset.pattern.permute.xlu0 0
    %40 = vperm.xlu0 %39, %v34
    %v41 = vpop.permute.xlu0 %40
    %44 = vset.pattern.permute.xlu0 0
    %45 = vperm.xlu0 %44, %v35
    %v46 = vpop.permute.xlu0 %45
    %49 = vset.pattern.permute.xlu0 0
    %50 = vperm.xlu0 %49, %v36
    %v51 = vpop.permute.xlu0 %50
    %54 = vset.pattern.permute.xlu0 0
    %55 = vperm.xlu0 %54, %v37
    %v56 = vpop.permute.xlu0 %55
    %v62 = vunpack.c.l.b16 %v30
    %v63 = vunpack.c.l.b16 %v31
    %v64 = vunpack.c.l.b16 %v32
    %v65 = vunpack.c.l.b16 %v33
    %v66 = vpack.c.b16 %v63, %v62
    %v67 = vpack.c.b16 %v65, %v64
    %v70 = vunpack.c.l.b16 %v28
    %v71 = vunpack.c.l.b16 %v29
    %v72 = vpack.c.b16 %v71, %v70
    %vm74 = vcmask 130048
    %v76 = vsel %vm74, %v66, 0
    %v79 = vsel %vm74, %v67, 0
    %81 = vmatprep.subr.bf16.mxu0 0
    %82 = vmatpush1.bf16.msra.mxu0 %v72
    %83 = vmatprep.subr.bf16.mxu0 0
    %84 = vmatpush1.bf16.msra.mxu0 0
    %85 = vmatprep.subr.bf16.mxu0 0
    %86 = vmatpush1.bf16.msra.mxu0 0
    %87 = vmatprep.subr.bf16.mxu0 0
    %88 = vmatpush1.bf16.msra.mxu0 0
    %89 = vmatprep.subr.bf16.mxu0 0
    %90 = vmatpush1.bf16.msra.mxu0 0
    %91 = vmatprep.subr.bf16.mxu0 0
    %92 = vmatpush1.bf16.msra.mxu0 0
    %93 = vmatprep.subr.bf16.mxu0 0
    %94 = vmatpush1.bf16.msra.mxu0 0
    %95 = vmatprep.subr.bf16.mxu0 0
    %96 = vmatpush1.bf16.msra.mxu0 0
    %97 = vmatprep.subr.bf16.mxu0 0
    %98 = vmatpush1.bf16.msra.mxu0 0
    %99 = vmatprep.subr.bf16.mxu0 0
    %100 = vmatpush1.bf16.msra.mxu0 0
    %101 = vmatprep.subr.bf16.mxu0 0
    %102 = vmatpush1.bf16.msra.mxu0 0
    %103 = vmatprep.subr.bf16.mxu0 0
    %104 = vmatpush1.bf16.msra.mxu0 0
    %105 = vmatprep.subr.bf16.mxu0 0
    %106 = vmatpush1.bf16.msra.mxu0 0
    %107 = vmatprep.subr.bf16.mxu0 0
    %108 = vmatpush1.bf16.msra.mxu0 0
    %109 = vmatprep.subr.bf16.mxu0 0
    %110 = vmatpush1.bf16.msra.mxu0 0
    %111 = vmatprep.subr.bf16.mxu0 0
    %112 = vmatpush1.bf16.msra.mxu0 0
    %113 = vmatprep.mubr.bf16.mxu0 0
    %114 = vmatmul.mubr.bf16.gmra.mrb[0].mxu0 %v76
    %v115 = vpop.f32.mrb[0].mxu0
    %v116 = vadd.f32 %v41, %v115
    %v117 = vpop.f32.mrb[0].mxu0
    %v118 = vpop.f32.mrb[0].mxu0
    %v119 = vadd.f32 %v46, %v118
    %v120 = vpop.f32.mrb[0].mxu0
    %121 = vmatprep.mubr.bf16.mxu0 0
    %122 = vmatmul.mubr.bf16.gmra.mrb[0].mxu0 %v79
    %v123 = vpop.f32.mrb[0].mxu0
    %v124 = vadd.f32 %v51, %v123
    %v125 = vpop.f32.mrb[0].mxu0
    %v126 = vpop.f32.mrb[0].mxu0
    %v127 = vadd.f32 %v56, %v126
    %v128 = vpop.f32.mrb[0].mxu0
    %129 = vdwg.mxu0
    %v130 = vtanh.pop %v116
    %v131 = vtanh.pop %v119
    %v132 = vtanh.pop %v124
    %v133 = vtanh.pop %v127
    %v134 = vld [vmem:[%s3] sm:$0xf]
    %v135 = vld [vmem:[%s3 + $0x4] sm:$0xf]
    %v136 = vld [vmem:[%s3 + $0x8] sm:$0xf]
    %v137 = vld [vmem:[%s3 + $0xc] sm:$0xf]
    %v138 = vpack.c.bf16 %v131, %v130
    %v139 = vpack.c.bf16 %v133, %v132
    %v140 = vld [vmem:[%s4] sm:$0xff]
    %v141 = vld [vmem:[%s4 + $0x8] sm:$0xff]
    %v142 = vld [vmem:[%s4 + $0x10] sm:$0xff]
    %v143 = vld [vmem:[%s4 + $0x18] sm:$0xff]
    %145 = vset.pattern.permute.xlu0 0
    %146 = vperm.xlu0 %145, %v140
    %v147 = vpop.permute.xlu0 %146
    %150 = vset.pattern.permute.xlu0 0
    %151 = vperm.xlu0 %150, %v141
    %v152 = vpop.permute.xlu0 %151
    %155 = vset.pattern.permute.xlu0 0
    %156 = vperm.xlu0 %155, %v142
    %v157 = vpop.permute.xlu0 %156
    %160 = vset.pattern.permute.xlu0 0
    %161 = vperm.xlu0 %160, %v143
    %v162 = vpop.permute.xlu0 %161
    %v168 = vunpack.c.l.b16 %v134
    %v169 = vunpack.c.l.b16 %v135
    %v170 = vunpack.c.l.b16 %v136
    %v171 = vunpack.c.l.b16 %v137
    %v172 = vpack.c.b16 %v169, %v168
    %v173 = vpack.c.b16 %v171, %v170
    %vm174 = vcmask 261120
    %v176 = vsel %vm174, %v172, 0
    %v179 = vsel %vm174, %v173, 0
    %181 = vmatprep.subr.bf16.mxu0 0
    %182 = vmatpush1.bf16.msra.mxu0 %v138
    %183 = vmatprep.subr.bf16.mxu0 0
    %184 = vmatpush1.bf16.msra.mxu0 %v139
    %185 = vmatprep.subr.bf16.mxu0 0
    %186 = vmatpush1.bf16.msra.mxu0 0
    %187 = vmatprep.subr.bf16.mxu0 0
    %188 = vmatpush1.bf16.msra.mxu0 0
    %189 = vmatprep.subr.bf16.mxu0 0
    %190 = vmatpush1.bf16.msra.mxu0 0
    %191 = vmatprep.subr.bf16.mxu0 0
    %192 = vmatpush1.bf16.msra.mxu0 0
    %193 = vmatprep.subr.bf16.mxu0 0
    %194 = vmatpush1.bf16.msra.mxu0 0
    %195 = vmatprep.subr.bf16.mxu0 0
    %196 = vmatpush1.bf16.msra.mxu0 0
    %197 = vmatprep.subr.bf16.mxu0 0
    %198 = vmatpush1.bf16.msra.mxu0 0
    %199 = vmatprep.subr.bf16.mxu0 0
    %200 = vmatpush1.bf16.msra.mxu0 0
    %201 = vmatprep.subr.bf16.mxu0 0
    %202 = vmatpush1.bf16.msra.mxu0 0
    %203 = vmatprep.subr.bf16.mxu0 0
    %204 = vmatpush1.bf16.msra.mxu0 0
    %205 = vmatprep.subr.bf16.mxu0 0
    %206 = vmatpush1.bf16.msra.mxu0 0
    %207 = vmatprep.subr.bf16.mxu0 0
    %208 = vmatpush1.bf16.msra.mxu0 0
    %209 = vmatprep.subr.bf16.mxu0 0
    %210 = vmatpush1.bf16.msra.mxu0 0
    %211 = vmatprep.subr.bf16.mxu0 0
    %212 = vmatpush1.bf16.msra.mxu0 0
    %213 = vmatprep.mubr.bf16.mxu0 0
    %214 = vmatmul.mubr.bf16.gmra.mrb[0].mxu0 %v176
    %v215 = vpop.f32.mrb[0].mxu0
    %v216 = vadd.f32 %v147, %v215
    %v217 = vpop.f32.mrb[0].mxu0
    %v218 = vpop.f32.mrb[0].mxu0
    %v219 = vadd.f32 %v152, %v218
    %v220 = vpop.f32.mrb[0].mxu0
    %221 = vmatprep.mubr.bf16.mxu0 0
    %222 = vmatmul.mubr.bf16.gmra.mrb[0].mxu0 %v179
    %v223 = vpop.f32.mrb[0].mxu0
    %v224 = vadd.f32 %v157, %v223
    %v225 = vpop.f32.mrb[0].mxu0
    %v226 = vpop.f32.mrb[0].mxu0
    %v227 = vadd.f32 %v162, %v226
    %v228 = vpop.f32.mrb[0].mxu0
    %229 = vdwg.mxu0
    %v230 = vtanh.pop %v216
    %v231 = vtanh.pop %v219
    %v232 = vtanh.pop %v224
    %v233 = vtanh.pop %v227
    %v234 = vld [vmem:[%s5] sm:$0x3]
    %v235 = vpack.c.bf16 %v231, %v230
    %v236 = vpack.c.bf16 %v233, %v232
    %v237 = vld [vmem:[%s6] sm:$0xf]
    %239 = vset.pattern.permute.xlu0 0
    %240 = vperm.xlu0 %239, %v237
    %v241 = vpop.permute.xlu0 %240
    %v244 = vsel %vm174, %v234, 0
    %246 = vmatprep.subr.bf16.mxu0 0
    %247 = vmatpush1.bf16.msra.mxu0 %v235
    %248 = vmatprep.subr.bf16.mxu0 0
    %249 = vmatpush1.bf16.msra.mxu0 %v236
    %250 = vmatprep.subr.bf16.mxu0 0
    %251 = vmatpush1.bf16.msra.mxu0 0
    %252 = vmatprep.subr.bf16.mxu0 0
    %253 = vmatpush1.bf16.msra.mxu0 0
    %254 = vmatprep.subr.bf16.mxu0 0
    %255 = vmatpush1.bf16.msra.mxu0 0
    %256 = vmatprep.subr.bf16.mxu0 0
    %257 = vmatpush1.bf16.msra.mxu0 0
    %258 = vmatprep.subr.bf16.mxu0 0
    %259 = vmatpush1.bf16.msra.mxu0 0
    %260 = vmatprep.subr.bf16.mxu0 0
    %261 = vmatpush1.bf16.msra.mxu0 0
    %262 = vmatprep.subr.bf16.mxu0 0
    %263 = vmatpush1.bf16.msra.mxu0 0
    %264 = vmatprep.subr.bf16.mxu0 0
    %265 = vmatpush1.bf16.msra.mxu0 0
    %266 = vmatprep.subr.bf16.mxu0 0
    %267 = vmatpush1.bf16.msra.mxu0 0
    %268 = vmatprep.subr.bf16.mxu0 0
    %269 = vmatpush1.bf16.msra.mxu0 0
    %270 = vmatprep.subr.bf16.mxu0 0
    %271 = vmatpush1.bf16.msra.mxu0 0
    %272 = vmatprep.subr.bf16.mxu0 0
    %273 = vmatpush1.bf16.msra.mxu0 0
    %274 = vmatprep.subr.bf16.mxu0 0
    %275 = vmatpush1.bf16.msra.mxu0 0
    %276 = vmatprep.subr.bf16.mxu0 0
    %277 = vmatpush1.bf16.msra.mxu0 0
    %278 = vmatprep.mubr.bf16.mxu0 0
    %279 = vmatmul.mubr.bf16.gmra.mrb[0].mxu0 %v244
    %v280 = vpop.f32.mrb[0].mxu0
    %v281 = vadd.f32 %v241, %v280
    %v282 = vpop.f32.mrb[0].mxu0
    %v283 = vpop.f32.mrb[0].mxu0
    %v284 = vpop.f32.mrb[0].mxu0
    %285 = vdwg.mxu0
    %vm286 = vcmask 60416
    %287 = vst.msk [vmem:[#allocation2] sm:$0xf] %vm286, %v281
    // Predicated region
    $region30: #{multiclass_forward.1} parent=1 // pred_check
      _
    $region31: #{multiclass_forward.1} parent=1 // pred_check_branch
      %289 = sbr.rel (0) target = $region33
    $region32: #{multiclass_forward.1} parent=1 // pred_region
      %s291 = ssub.s32 64, 64
      %292 = vsyncadd [#allocation3], %s291
      %s294 = sshll.u32 [#allocation2], 4
      %s295 = int_to_ptr.vmem [resolvable:$true] %s294
      %297 = dma.vmem_to_hbm [thread:$0]  %s295, 64, %s7, [#allocation3]
    $region33: #{multiclass_forward.1} parent=1 // pred_fallthru
      _
    // Predicated region
    $region34: #{multiclass_forward.1} parent=1 // pred_check
      _
    $region35: #{multiclass_forward.1} parent=1 // pred_check_branch
      %299 = sbr.rel (0) target = $region37
    $region36: #{multiclass_forward.1} parent=1 // pred_region
      %300 = dma.done [#allocation3], 64
    $region37: #{multiclass_forward.1} parent=1 // pred_fallthru
      _
    %301 = vsyncpa [#allocation3], 1

</llo_original>
